<compile_context>
chip_gen: v7x
topology: tpu7x:2x2x1
jax: 0.10.0
libtpu: 0.0.40
codegen_flags: <defaults>
</compile_context>

<pallas_src>
import math

import jax
import jax.numpy as jnp
from jax import lax
from jax.experimental import pallas as pl
from jax.experimental.pallas import tpu as pltpu

LANE = 128      # lane width (last dim)
SUBLANE = 8     # f32 sublane (second-to-last dim)
BN_EPS = 1e-5   # torch.nn.BatchNorm1d default


def _round_up(n, m):
    return ((n + m - 1) // m) * m


def _gelu(x):
    # Exact erf-based GELU, matching torch.nn.GELU() default.
    return 0.5 * x * (1.0 + lax.erf(x * (1.0 / math.sqrt(2.0))))


# ----------------------------------------------------------------------------
# Kernel
# ----------------------------------------------------------------------------
def _make_resmlp_kernel(n_inter):
    """Build a fused kernel for `n_inter` intermediate residual blocks."""

    if n_inter > 0:
        def kernel(x_ref, w1_ref, wi_ref, b_ref, s_ref, t_ref, wl_ref, o_ref):
            # first block: Linear -> GELU -> folded BatchNorm
            h = jnp.dot(x_ref[...], w1_ref[...],
                        preferred_element_type=jnp.float32) + b_ref[0]
            h = _gelu(h)
            h = h * s_ref[0] + t_ref[0]

            # residual intermediate blocks: h <- h + BN(GELU(Linear(h)))
            for k in range(n_inter):            # static unroll
                y = jnp.dot(h, wi_ref[k],
                            preferred_element_type=jnp.float32) + b_ref[k + 1]
                y = _gelu(y)
                y = y * s_ref[k + 1] + t_ref[k + 1]
                h = h + y

            # last layer: bias-free Linear
            o_ref[...] = jnp.dot(h, wl_ref[...],
                                 preferred_element_type=jnp.float32
                                 ).astype(o_ref.dtype)
    else:
        def kernel(x_ref, w1_ref, b_ref, s_ref, t_ref, wl_ref, o_ref):
            h = jnp.dot(x_ref[...], w1_ref[...],
                        preferred_element_type=jnp.float32) + b_ref[0]
            h = _gelu(h)
            h = h * s_ref[0] + t_ref[0]
            o_ref[...] = jnp.dot(h, wl_ref[...],
                                 preferred_element_type=jnp.float32
                                 ).astype(o_ref.dtype)

    return kernel


# ----------------------------------------------------------------------------
# One-time parameter preparation (padding + BN folding) -- cached by the caller.
# ----------------------------------------------------------------------------
def prepare_padded_params(params, n_layers, input_size, hidden_size, output_size):
    in_pad = _round_up(max(input_size, SUBLANE), SUBLANE)   # contraction dim -> 8
    hid_pad = _round_up(max(hidden_size, LANE), LANE)       # lane dim -> 128
    out_pad = _round_up(max(output_size, LANE), LANE)
    n_inter = n_layers - 1

    def pad2(a, rows, cols):
        a = a.astype(jnp.float32)
        r, c = a.shape
        return jnp.pad(a, ((0, rows - r), (0, cols - c)))

    def fold_bn(bn):
        scale = bn["gamma"] / jnp.sqrt(bn["var"] + BN_EPS)
        shift = bn["beta"] - bn["mean"] * scale
        return scale, shift

    w_first = pad2(params["w_first"], in_pad, hid_pad)
    w_last = pad2(params["w_last"], hid_pad, out_pad)

    b_rows, s_rows, t_rows, w_inter = [], [], [], []
    s0, t0 = fold_bn(params["bn_first"])
    b_rows.append(pad2(params["b_first"].reshape(1, -1), 1, hid_pad))
    s_rows.append(pad2(s0.reshape(1, -1), 1, hid_pad))
    t_rows.append(pad2(t0.reshape(1, -1), 1, hid_pad))

    for k in range(n_inter):
        sk, tk = fold_bn(params["bn_inter"][k])
        w_inter.append(pad2(params["w_inter"][k], hid_pad, hid_pad))
        b_rows.append(pad2(params["b_inter"][k].reshape(1, -1), 1, hid_pad))
        s_rows.append(pad2(sk.reshape(1, -1), 1, hid_pad))
        t_rows.append(pad2(tk.reshape(1, -1), 1, hid_pad))

    b_stack = jnp.stack(b_rows)   # (n_layers, 1, hid_pad)
    s_stack = jnp.stack(s_rows)   # (n_layers, 1, hid_pad)
    t_stack = jnp.stack(t_rows)   # (n_layers, 1, hid_pad)

    ops = [w_first]
    if n_inter > 0:
        ops.append(jnp.stack(w_inter))   # (n_inter, hid_pad, hid_pad)
    ops += [b_stack, s_stack, t_stack, w_last]

    meta = dict(in_pad=in_pad, hid_pad=hid_pad, out_pad=out_pad, n_inter=n_inter)
    return tuple(ops), meta


# ----------------------------------------------------------------------------
# Forward wrapper
# ----------------------------------------------------------------------------
def resmlp_forward(x, padded_params, meta, output_size, *, batch_tile=512):
    in_pad = meta["in_pad"]
    out_pad = meta["out_pad"]
    n_inter = meta["n_inter"]

    B, F = x.shape
    B8 = _round_up(max(B, SUBLANE), SUBLANE)
    tb = min(batch_tile, B8)                 # rows per grid step (multiple of 8)
    B_pad = _round_up(B8, tb)
    n_grid = B_pad // tb

    x_p = jnp.pad(x.astype(jnp.float32), ((0, B_pad - B), (0, in_pad - F)))

    # Activations stream over the batch grid; parameters stay resident
    # (constant index_map -> fetched once, reused every grid step).
    in_specs = [pl.BlockSpec((tb, in_pad), lambda i: (i, 0))]
    for p in padded_params:
        zeros = (0,) * p.ndim
        in_specs.append(pl.BlockSpec(p.shape, lambda i, z=zeros: z))
    out_specs = pl.BlockSpec((tb, out_pad), lambda i: (i, 0))

    kernel = _make_resmlp_kernel(n_inter)

    out_p = pl.pallas_call(
        kernel,
        out_shape=jax.ShapeDtypeStruct((B_pad, out_pad), jnp.float32),
        grid=(n_grid,),
        in_specs=in_specs,
        out_specs=out_specs,
        compiler_params=pltpu.CompilerParams(
            dimension_semantics=("parallel",)),  # batch tiles shard across 2 TCs on v7x
    )(x_p, *padded_params)

    return out_p[:B, :output_size]


# ----------------------------------------------------------------------------
# Parameter synthesis + pure-JAX reference
# ----------------------------------------------------------------------------
def init_params(key, n_layers, input_size, hidden_size, output_size):
    n_keys = 2 + 4 + (n_layers - 1) * 6 + 1
    keys = iter(jax.random.split(key, n_keys))

    def lin(kin, kout):
        kw, kb = next(keys), next(keys)
        bound = 1.0 / math.sqrt(kin)
        w = jax.random.uniform(kw, (kin, kout), jnp.float32, -bound, bound)
        b = jax.random.uniform(kb, (kout,), jnp.float32, -bound, bound)
        return w, b

    def bn(h):
        kg, kb, km, kv = next(keys), next(keys), next(keys), next(keys)
        return dict(
            gamma=1.0 + 0.1 * jax.random.normal(kg, (h,), jnp.float32),
            beta=0.1 * jax.random.normal(kb, (h,), jnp.float32),
            mean=0.1 * jax.random.normal(km, (h,), jnp.float32),
            var=jax.random.uniform(kv, (h,), jnp.float32, 0.5, 1.5),
        )

    w1, b1 = lin(input_size, hidden_size)
    params = dict(w_first=w1, b_first=b1, bn_first=bn(hidden_size),
                  w_inter=[], b_inter=[], bn_inter=[])
    for _ in range(n_layers - 1):
        w, b = lin(hidden_size, hidden_size)
        params["w_inter"].append(w)
        params["b_inter"].append(b)
        params["bn_inter"].append(bn(hidden_size))
    kw = next(keys)
    bound = 1.0 / math.sqrt(hidden_size)
    params["w_last"] = jax.random.uniform(kw, (hidden_size, output_size),
                                          jnp.float32, -bound, bound)
    return params


def resmlp_reference(x, params):
    hp = jax.lax.Precision.HIGHEST

    def bn_apply(h, bn):
        scale = bn["gamma"] / jnp.sqrt(bn["var"] + BN_EPS)
        return (h - bn["mean"]) * scale + bn["beta"]

    h = jnp.dot(x, params["w_first"], precision=hp) + params["b_first"]
    h = _gelu(h)
    h = bn_apply(h, params["bn_first"])
    for w, b, bn in zip(params["w_inter"], params["b_inter"], params["bn_inter"]):
        y = jnp.dot(h, w, precision=hp) + b
        y = _gelu(y)
        y = bn_apply(y, bn)
        h = h + y
    return jnp.dot(h, params["w_last"], precision=hp)


if __name__ == "__main__":
    n_layers, input_size, hidden_size, output_size = 3, 16, 32, 8
    B = 16

    key = jax.random.PRNGKey(0)
    kx, kp = jax.random.split(key)
    x = jax.random.normal(kx, (B, input_size), dtype=jnp.float32)
    params = init_params(kp, n_layers, input_size, hidden_size, output_size)

    # Pad / fold parameters ONCE (cache this in real use).
    padded, meta = prepare_padded_params(params, n_layers, input_size,
                                         hidden_size, output_size)

    out = resmlp_forward(x, padded, meta, output_size)
    out = jax.block_until_ready(out)

    ref = resmlp_reference(x, params)
    assert out.shape == (B, output_size), out.shape
    max_err = jnp.max(jnp.abs(out - ref))
    assert jnp.allclose(out, ref, atol=1e-4, rtol=1e-4), f"max abs err = {max_err}"

    print("KERNEL_OK")
</pallas_src>

<mosaic_0001>
module attributes {stable_mosaic.version = 11 : i64} {
  func.func @kernel(%arg0: i32, %arg1: memref<16x16xf32, #tpu.memory_space<vmem>>, %arg2: memref<16x128xf32, #tpu.memory_space<vmem>>, %arg3: memref<2x128x128xf32, #tpu.memory_space<vmem>>, %arg4: memref<3x1x128xf32, #tpu.memory_space<vmem>>, %arg5: memref<3x1x128xf32, #tpu.memory_space<vmem>>, %arg6: memref<3x1x128xf32, #tpu.memory_space<vmem>>, %arg7: memref<128x128xf32, #tpu.memory_space<vmem>>, %arg8: memref<16x128xf32, #tpu.memory_space<vmem>>) attributes {dimension_semantics = [#tpu.dimension_semantics<parallel>], iteration_bounds = array<i64: 1>, scalar_prefetch = 0 : i64, scratch_operands = 0 : i64, tpu.core_type = #tpu.core_type<tc>, window_params = [{transform_indices = @transform_0, window_bounds = array<i64: 16, 16>}, {pipeline_mode = #tpu.pipeline_mode<synchronous>, transform_indices = @transform_1, window_bounds = array<i64: 16, 128>}, {pipeline_mode = #tpu.pipeline_mode<synchronous>, transform_indices = @transform_2, window_bounds = array<i64: 2, 128, 128>}, {pipeline_mode = #tpu.pipeline_mode<synchronous>, transform_indices = @transform_3, window_bounds = array<i64: 3, 1, 128>}, {pipeline_mode = #tpu.pipeline_mode<synchronous>, transform_indices = @transform_4, window_bounds = array<i64: 3, 1, 128>}, {pipeline_mode = #tpu.pipeline_mode<synchronous>, transform_indices = @transform_5, window_bounds = array<i64: 3, 1, 128>}, {pipeline_mode = #tpu.pipeline_mode<synchronous>, transform_indices = @transform_6, window_bounds = array<i64: 128, 128>}, {transform_indices = @transform_7, window_bounds = array<i64: 16, 128>}]} {
    %c0 = arith.constant 0 : index
    %c0_0 = arith.constant 0 : index
    %0 = vector.load %arg1[%c0, %c0_0] : memref<16x16xf32, #tpu.memory_space<vmem>>, vector<16x16xf32>
    %c0_1 = arith.constant 0 : index
    %c0_2 = arith.constant 0 : index
    %1 = vector.load %arg2[%c0_1, %c0_2] : memref<16x128xf32, #tpu.memory_space<vmem>>, vector<16x128xf32>
    %cst = arith.constant dense<0.000000e+00> : vector<16x128xf32>
    %2 = tpu.matmul %0, %1, %cst {dimension_numbers = #tpu.dot_dimension_numbers<[1], [0], [0], [1], [0, 0, 1, 1], [], []>} : vector<16x16xf32>, vector<16x128xf32>, vector<16x128xf32> -> vector<16x128xf32>
    %c0_3 = arith.constant 0 : index
    %c0_4 = arith.constant 0 : index
    %c0_5 = arith.constant 0 : index
    %3 = vector.load %arg4[%c0_3, %c0_4, %c0_5] : memref<3x1x128xf32, #tpu.memory_space<vmem>>, vector<1x1x128xf32>
    %4 = vector.shape_cast %3 : vector<1x1x128xf32> to vector<1x128xf32>
    %5 = vector.broadcast %4 : vector<1x128xf32> to vector<16x128xf32>
    %6 = arith.addf %2, %5 : vector<16x128xf32>
    %cst_6 = arith.constant 5.000000e-01 : f32
    %7 = vector.broadcast %cst_6 : f32 to vector<16x128xf32>
    %8 = arith.mulf %7, %6 : vector<16x128xf32>
    %cst_7 = arith.constant 0.707106769 : f32
    %9 = vector.broadcast %cst_7 : f32 to vector<16x128xf32>
    %10 = arith.mulf %6, %9 : vector<16x128xf32>
    %11 = math.erf %10 : vector<16x128xf32>
    %cst_8 = arith.constant 1.000000e+00 : f32
    %12 = vector.broadcast %cst_8 : f32 to vector<16x128xf32>
    %13 = arith.addf %12, %11 : vector<16x128xf32>
    %14 = arith.mulf %8, %13 : vector<16x128xf32>
    %c0_9 = arith.constant 0 : index
    %c0_10 = arith.constant 0 : index
    %c0_11 = arith.constant 0 : index
    %15 = vector.load %arg5[%c0_9, %c0_10, %c0_11] : memref<3x1x128xf32, #tpu.memory_space<vmem>>, vector<1x1x128xf32>
    %16 = vector.shape_cast %15 : vector<1x1x128xf32> to vector<1x128xf32>
    %17 = vector.broadcast %16 : vector<1x128xf32> to vector<16x128xf32>
    %18 = arith.mulf %14, %17 : vector<16x128xf32>
    %c0_12 = arith.constant 0 : index
    %c0_13 = arith.constant 0 : index
    %c0_14 = arith.constant 0 : index
    %19 = vector.load %arg6[%c0_12, %c0_13, %c0_14] : memref<3x1x128xf32, #tpu.memory_space<vmem>>, vector<1x1x128xf32>
    %20 = vector.shape_cast %19 : vector<1x1x128xf32> to vector<1x128xf32>
    %21 = vector.broadcast %20 : vector<1x128xf32> to vector<16x128xf32>
    %22 = arith.addf %18, %21 : vector<16x128xf32>
    %c0_15 = arith.constant 0 : index
    %c0_16 = arith.constant 0 : index
    %c0_17 = arith.constant 0 : index
    %23 = vector.load %arg3[%c0_15, %c0_16, %c0_17] : memref<2x128x128xf32, #tpu.memory_space<vmem>>, vector<1x128x128xf32>
    %24 = vector.shape_cast %23 : vector<1x128x128xf32> to vector<128x128xf32>
    %cst_18 = arith.constant dense<0.000000e+00> : vector<16x128xf32>
    %25 = tpu.matmul %22, %24, %cst_18 {dimension_numbers = #tpu.dot_dimension_numbers<[1], [0], [0], [1], [0, 0, 1, 1], [], []>} : vector<16x128xf32>, vector<128x128xf32>, vector<16x128xf32> -> vector<16x128xf32>
    %c1 = arith.constant 1 : index
    %c0_19 = arith.constant 0 : index
    %c0_20 = arith.constant 0 : index
    %26 = vector.load %arg4[%c1, %c0_19, %c0_20] : memref<3x1x128xf32, #tpu.memory_space<vmem>>, vector<1x1x128xf32>
    %27 = vector.shape_cast %26 : vector<1x1x128xf32> to vector<1x128xf32>
    %28 = vector.broadcast %27 : vector<1x128xf32> to vector<16x128xf32>
    %29 = arith.addf %25, %28 : vector<16x128xf32>
    %cst_21 = arith.constant 5.000000e-01 : f32
    %30 = vector.broadcast %cst_21 : f32 to vector<16x128xf32>
    %31 = arith.mulf %30, %29 : vector<16x128xf32>
    %cst_22 = arith.constant 0.707106769 : f32
    %32 = vector.broadcast %cst_22 : f32 to vector<16x128xf32>
    %33 = arith.mulf %29, %32 : vector<16x128xf32>
    %34 = math.erf %33 : vector<16x128xf32>
    %cst_23 = arith.constant 1.000000e+00 : f32
    %35 = vector.broadcast %cst_23 : f32 to vector<16x128xf32>
    %36 = arith.addf %35, %34 : vector<16x128xf32>
    %37 = arith.mulf %31, %36 : vector<16x128xf32>
    %c1_24 = arith.constant 1 : index
    %c0_25 = arith.constant 0 : index
    %c0_26 = arith.constant 0 : index
    %38 = vector.load %arg5[%c1_24, %c0_25, %c0_26] : memref<3x1x128xf32, #tpu.memory_space<vmem>>, vector<1x1x128xf32>
    %39 = vector.shape_cast %38 : vector<1x1x128xf32> to vector<1x128xf32>
    %40 = vector.broadcast %39 : vector<1x128xf32> to vector<16x128xf32>
    %41 = arith.mulf %37, %40 : vector<16x128xf32>
    %c1_27 = arith.constant 1 : index
    %c0_28 = arith.constant 0 : index
    %c0_29 = arith.constant 0 : index
    %42 = vector.load %arg6[%c1_27, %c0_28, %c0_29] : memref<3x1x128xf32, #tpu.memory_space<vmem>>, vector<1x1x128xf32>
    %43 = vector.shape_cast %42 : vector<1x1x128xf32> to vector<1x128xf32>
    %44 = vector.broadcast %43 : vector<1x128xf32> to vector<16x128xf32>
    %45 = arith.addf %41, %44 : vector<16x128xf32>
    %46 = arith.addf %22, %45 : vector<16x128xf32>
    %c1_30 = arith.constant 1 : index
    %c0_31 = arith.constant 0 : index
    %c0_32 = arith.constant 0 : index
    %47 = vector.load %arg3[%c1_30, %c0_31, %c0_32] : memref<2x128x128xf32, #tpu.memory_space<vmem>>, vector<1x128x128xf32>
    %48 = vector.shape_cast %47 : vector<1x128x128xf32> to vector<128x128xf32>
    %cst_33 = arith.constant dense<0.000000e+00> : vector<16x128xf32>
    %49 = tpu.matmul %46, %48, %cst_33 {dimension_numbers = #tpu.dot_dimension_numbers<[1], [0], [0], [1], [0, 0, 1, 1], [], []>} : vector<16x128xf32>, vector<128x128xf32>, vector<16x128xf32> -> vector<16x128xf32>
    %c2 = arith.constant 2 : index
    %c0_34 = arith.constant 0 : index
    %c0_35 = arith.constant 0 : index
    %50 = vector.load %arg4[%c2, %c0_34, %c0_35] : memref<3x1x128xf32, #tpu.memory_space<vmem>>, vector<1x1x128xf32>
    %51 = vector.shape_cast %50 : vector<1x1x128xf32> to vector<1x128xf32>
    %52 = vector.broadcast %51 : vector<1x128xf32> to vector<16x128xf32>
    %53 = arith.addf %49, %52 : vector<16x128xf32>
    %cst_36 = arith.constant 5.000000e-01 : f32
    %54 = vector.broadcast %cst_36 : f32 to vector<16x128xf32>
    %55 = arith.mulf %54, %53 : vector<16x128xf32>
    %cst_37 = arith.constant 0.707106769 : f32
    %56 = vector.broadcast %cst_37 : f32 to vector<16x128xf32>
    %57 = arith.mulf %53, %56 : vector<16x128xf32>
    %58 = math.erf %57 : vector<16x128xf32>
    %cst_38 = arith.constant 1.000000e+00 : f32
    %59 = vector.broadcast %cst_38 : f32 to vector<16x128xf32>
    %60 = arith.addf %59, %58 : vector<16x128xf32>
    %61 = arith.mulf %55, %60 : vector<16x128xf32>
    %c2_39 = arith.constant 2 : index
    %c0_40 = arith.constant 0 : index
    %c0_41 = arith.constant 0 : index
    %62 = vector.load %arg5[%c2_39, %c0_40, %c0_41] : memref<3x1x128xf32, #tpu.memory_space<vmem>>, vector<1x1x128xf32>
    %63 = vector.shape_cast %62 : vector<1x1x128xf32> to vector<1x128xf32>
    %64 = vector.broadcast %63 : vector<1x128xf32> to vector<16x128xf32>
    %65 = arith.mulf %61, %64 : vector<16x128xf32>
    %c2_42 = arith.constant 2 : index
    %c0_43 = arith.constant 0 : index
    %c0_44 = arith.constant 0 : index
    %66 = vector.load %arg6[%c2_42, %c0_43, %c0_44] : memref<3x1x128xf32, #tpu.memory_space<vmem>>, vector<1x1x128xf32>
    %67 = vector.shape_cast %66 : vector<1x1x128xf32> to vector<1x128xf32>
    %68 = vector.broadcast %67 : vector<1x128xf32> to vector<16x128xf32>
    %69 = arith.addf %65, %68 : vector<16x128xf32>
    %70 = arith.addf %46, %69 : vector<16x128xf32>
    %c0_45 = arith.constant 0 : index
    %c0_46 = arith.constant 0 : index
    %71 = vector.load %arg7[%c0_45, %c0_46] : memref<128x128xf32, #tpu.memory_space<vmem>>, vector<128x128xf32>
    %cst_47 = arith.constant dense<0.000000e+00> : vector<16x128xf32>
    %72 = tpu.matmul %70, %71, %cst_47 {dimension_numbers = #tpu.dot_dimension_numbers<[1], [0], [0], [1], [0, 0, 1, 1], [], []>} : vector<16x128xf32>, vector<128x128xf32>, vector<16x128xf32> -> vector<16x128xf32>
    %c0_48 = arith.constant 0 : index
    %c0_49 = arith.constant 0 : index
    %73 = vector.load %arg8[%c0_48, %c0_49] : memref<16x128xf32, #tpu.memory_space<vmem>>, vector<16x128xf32>
    tpu.vector_store %arg8[%c0_48, %c0_49], %72 {strides = array<i32>} : memref<16x128xf32, #tpu.memory_space<vmem>>, vector<16x128xf32>,
    return
  }
  func.func @transform_0(%arg0: i32) -> (i32, i32) {
    %c0_i32 = arith.constant 0 : i32
    %c0_i32_0 = arith.constant 0 : i32
    return %arg0, %c0_i32 : i32, i32
  }
  func.func @transform_1(%arg0: i32) -> (i32, i32) {
    %c0_i32 = arith.constant 0 : i32
    %c0_i32_0 = arith.constant 0 : i32
    %c0_i32_1 = arith.constant 0 : i32
    return %c0_i32, %c0_i32_0 : i32, i32
  }
  func.func @transform_2(%arg0: i32) -> (i32, i32, i32) {
    %c0_i32 = arith.constant 0 : i32
    %c0_i32_0 = arith.constant 0 : i32
    %c0_i32_1 = arith.constant 0 : i32
    %c0_i32_2 = arith.constant 0 : i32
    return %c0_i32, %c0_i32_0, %c0_i32_1 : i32, i32, i32
  }
  func.func @transform_3(%arg0: i32) -> (i32, i32, i32) {
    %c0_i32 = arith.constant 0 : i32
    %c0_i32_0 = arith.constant 0 : i32
    %c0_i32_1 = arith.constant 0 : i32
    %c0_i32_2 = arith.constant 0 : i32
    return %c0_i32, %c0_i32_0, %c0_i32_1 : i32, i32, i32
  }
  func.func @transform_4(%arg0: i32) -> (i32, i32, i32) {
    %c0_i32 = arith.constant 0 : i32
    %c0_i32_0 = arith.constant 0 : i32
    %c0_i32_1 = arith.constant 0 : i32
    %c0_i32_2 = arith.constant 0 : i32
    return %c0_i32, %c0_i32_0, %c0_i32_1 : i32, i32, i32
  }
  func.func @transform_5(%arg0: i32) -> (i32, i32, i32) {
    %c0_i32 = arith.constant 0 : i32
    %c0_i32_0 = arith.constant 0 : i32
    %c0_i32_1 = arith.constant 0 : i32
    %c0_i32_2 = arith.constant 0 : i32
    return %c0_i32, %c0_i32_0, %c0_i32_1 : i32, i32, i32
  }
  func.func @transform_6(%arg0: i32) -> (i32, i32) {
    %c0_i32 = arith.constant 0 : i32
    %c0_i32_0 = arith.constant 0 : i32
    %c0_i32_1 = arith.constant 0 : i32
    return %c0_i32, %c0_i32_0 : i32, i32
  }
  func.func @transform_7(%arg0: i32) -> (i32, i32) {
    %c0_i32 = arith.constant 0 : i32
    %c0_i32_0 = arith.constant 0 : i32
    return %arg0, %c0_i32 : i32, i32
  }
}

</mosaic_0001>

<llo_original>
// kernel: tpu_custom_call.1
$region0: #{tpu_custom_call.1}
  #allocation0 [shape = 'u32[]', space=smem, size = 0x4, offset = 0x4, fixed_abs, tag = 'smem constant byte address 0x4 - core index']
  #allocation1 [shape = 'u32[144,128]{1,0:T(1,128)}', space=vmem, size = 0x12000, scoped, tag = 'internal scratch']
  %s0 = inlined_call_operand.hbm [shape: f32[16,16], index: 0, kind: input, shape index: {}]
  %s1 = inlined_call_operand.hbm [shape: f32[16,128], index: 1, kind: input, shape index: {}]
  %s2 = inlined_call_operand.hbm [shape: f32[2,128,128], index: 2, kind: input, shape index: {}]
  %s3 = inlined_call_operand.vmem [shape: f32[3,1,128], index: 3, kind: input, shape index: {}]
  %s4 = inlined_call_operand.vmem [shape: f32[3,1,128], index: 4, kind: input, shape index: {}]
  %s5 = inlined_call_operand.vmem [shape: f32[3,1,128], index: 5, kind: input, shape index: {}]
  %s6 = inlined_call_operand.hbm [shape: f32[128,128], index: 6, kind: input, shape index: {}]
  %s7 = inlined_call_operand.hbm [shape: f32[16,128], index: 7, kind: output, shape index: {}]
  %s8 = sld [smem:[#allocation0]]
  $region54: #{tpu_custom_call.1} parent=0
    _
  %s10 = ssub.s32 1, %s8
  %s11 = scalar_select 0, %s10, %s8
  $region1: #{tpu_custom_call.1} parent=0
    #allocation2 [shape = 'u8[8192]{0}', space=vmem, size = 0x2000, scoped, tag = 'input window, operand 0, single buffered']
    #allocation3 [shape = 's32[1]{0}', space=sflag, size = 0x4, scoped, tag = 'scoped memory for tpu_custom_call.1']
    #allocation4 [shape = 's32[1]{0}', space=sflag, size = 0x4, scoped, tag = 'scoped memory for tpu_custom_call.1']
    #allocation5 [shape = 'u8[8192]{0}', space=vmem, size = 0x2000, scoped, tag = 'input window, operand 1, single buffered']
    #allocation6 [shape = 's32[1]{0}', space=sflag, size = 0x4, scoped, tag = 'scoped memory for tpu_custom_call.1']
    #allocation7 [shape = 'u8[131072]{0}', space=vmem, size = 0x20000, scoped, tag = 'input window, operand 2, single buffered']
    #allocation8 [shape = 'u8[65536]{0}', space=vmem, size = 0x10000, scoped, tag = 'input window, operand 6, single buffered']
    #allocation9 [shape = 's32[1]{0}', space=sflag, size = 0x4, scoped, tag = 'scoped memory for tpu_custom_call.1']
    #allocation10 [shape = 'u8[8192]{0}', space=vmem, size = 0x2000, scoped, tag = 'output window, operand 0, single buffered']
    %12 = vsyncpa [#allocation3], 0
    %13 = vsyncpa [#allocation6], 0
    %14 = vsyncpa [#allocation9], 0
    %15 = vsyncpa [#allocation4], 0
    // Predicated region
    $region2: #{tpu_custom_call.1} parent=1 // pred_check
      _
    $region3: #{tpu_custom_call.1} parent=1 // pred_check_branch
      %17 = sbr.rel (0) target = $region5
    $region4: #{tpu_custom_call.1} parent=1 // pred_region
      %s19 = ssub.s32 256, 256
      %20 = vsyncadd [#allocation3], %s19
      %s21 = sshll.u32 [#allocation2], 4
      %s22 = int_to_ptr.vmem [resolvable:$true] %s21
      %27 = dma.hbm_to_vmem [thread:$0]  %s0, 256, %s22, [#allocation3], 128, 128, 8
    $region5: #{tpu_custom_call.1} parent=1 // pred_fallthru
      _
    // Predicated region
    $region6: #{tpu_custom_call.1} parent=1 // pred_check
      _
    $region7: #{tpu_custom_call.1} parent=1 // pred_check_branch
      %29 = sbr.rel (0) target = $region9
    $region8: #{tpu_custom_call.1} parent=1 // pred_region
      %s31 = ssub.s32 256, 256
      %32 = vsyncadd [#allocation6], %s31
      %s33 = sshll.u32 [#allocation5], 4
      %s34 = int_to_ptr.vmem [resolvable:$true] %s33
      %39 = dma.hbm_to_vmem [thread:$0]  %s1, 256, %s34, [#allocation6], 128, 128, 8
    $region9: #{tpu_custom_call.1} parent=1 // pred_fallthru
      _
    // Predicated region
    $region10: #{tpu_custom_call.1} parent=1 // pred_check
      _
    $region11: #{tpu_custom_call.1} parent=1 // pred_check_branch
      %41 = sbr.rel (0) target = $region13
    $region12: #{tpu_custom_call.1} parent=1 // pred_region
      %s43 = ssub.s32 4096, 4096
      %44 = vsyncadd [#allocation6], %s43
      %s45 = sshll.u32 [#allocation7], 4
      %s46 = int_to_ptr.vmem [resolvable:$true] %s45
      %51 = dma.hbm_to_vmem [thread:$0]  %s2, 4096, %s46, [#allocation6], 128, 128, 8
    $region13: #{tpu_custom_call.1} parent=1 // pred_fallthru
      _
    // Predicated region
    $region14: #{tpu_custom_call.1} parent=1 // pred_check
      _
    $region15: #{tpu_custom_call.1} parent=1 // pred_check_branch
      %53 = sbr.rel (0) target = $region17
    $region16: #{tpu_custom_call.1} parent=1 // pred_region
      _
    $region17: #{tpu_custom_call.1} parent=1 // pred_fallthru
      _
    // Predicated region
    $region18: #{tpu_custom_call.1} parent=1 // pred_check
      _
    $region19: #{tpu_custom_call.1} parent=1 // pred_check_branch
      %55 = sbr.rel (0) target = $region21
    $region20: #{tpu_custom_call.1} parent=1 // pred_region
      _
    $region21: #{tpu_custom_call.1} parent=1 // pred_fallthru
      _
    // Predicated region
    $region22: #{tpu_custom_call.1} parent=1 // pred_check
      _
    $region23: #{tpu_custom_call.1} parent=1 // pred_check_branch
      %57 = sbr.rel (0) target = $region25
    $region24: #{tpu_custom_call.1} parent=1 // pred_region
      _
    $region25: #{tpu_custom_call.1} parent=1 // pred_fallthru
      _
    // Predicated region
    $region26: #{tpu_custom_call.1} parent=1 // pred_check
      _
    $region27: #{tpu_custom_call.1} parent=1 // pred_check_branch
      %59 = sbr.rel (0) target = $region29
    $region28: #{tpu_custom_call.1} parent=1 // pred_region
      %s61 = ssub.s32 2048, 2048
      %62 = vsyncadd [#allocation9], %s61
      %s63 = sshll.u32 [#allocation8], 4
      %s64 = int_to_ptr.vmem [resolvable:$true] %s63
      %69 = dma.hbm_to_vmem [thread:$0]  %s6, 2048, %s64, [#allocation9], 128, 128, 8
    $region29: #{tpu_custom_call.1} parent=1 // pred_fallthru
      _
    // Predicated region
    $region30: #{tpu_custom_call.1} parent=1 // pred_check
      _
    $region31: #{tpu_custom_call.1} parent=1 // pred_check_branch
      %71 = sbr.rel (0) target = $region33
    $region32: #{tpu_custom_call.1} parent=1 // pred_region
      %72 = dma.done [#allocation3], 256
    $region33: #{tpu_custom_call.1} parent=1 // pred_fallthru
      _
    // Predicated region
    $region34: #{tpu_custom_call.1} parent=1 // pred_check
      _
    $region35: #{tpu_custom_call.1} parent=1 // pred_check_branch
      %74 = sbr.rel (0) target = $region37
    $region36: #{tpu_custom_call.1} parent=1 // pred_region
      %75 = dma.done [#allocation6], 256
    $region37: #{tpu_custom_call.1} parent=1 // pred_fallthru
      _
    // Predicated region
    $region38: #{tpu_custom_call.1} parent=1 // pred_check
      _
    $region39: #{tpu_custom_call.1} parent=1 // pred_check_branch
      %77 = sbr.rel (0) target = $region41
    $region40: #{tpu_custom_call.1} parent=1 // pred_region
      %78 = dma.done [#allocation6], 4096
    $region41: #{tpu_custom_call.1} parent=1 // pred_fallthru
      _
    // Predicated region
    $region42: #{tpu_custom_call.1} parent=1 // pred_check
      _
    $region43: #{tpu_custom_call.1} parent=1 // pred_check_branch
      %80 = sbr.rel (0) target = $region45
    $region44: #{tpu_custom_call.1} parent=1 // pred_region
      %81 = dma.done [#allocation9], 2048
    $region45: #{tpu_custom_call.1} parent=1 // pred_fallthru
      _
    %v82 = vld [vmem:[#allocation2] sm:$0xff]
    %v83 = vld [vmem:[#allocation2 + $0x8] sm:$0xff]
    %v84 = vld [vmem:[#allocation5] sm:$0xff]
    %v85 = vld [vmem:[#allocation5 + $0x8] sm:$0xff]
    %v86 = vld [vmem:[%s3] sm:$0x1]
    %v88 = vlaneseq
    %v89 = vshrl.u32 %v88, 7
    %v90 = vsub.s32 0, %v89
    %v91 = vrot.slane %v86, %v90
    %vm93 = vcmask 130048
    %v95 = vsel %vm93, %v82, 0
    %v98 = vsel %vm93, %v83, 0
    %100 = vmatprep.subr.mxu0 0.0
    %101 = vmatpush1.msra.mxu0 %v84
    %102 = vmatprep.subr.mxu0 0.0
    %103 = vmatpush1.msra.mxu0 %v85
    %104 = vmatprep.subr.mxu0 0.0
    %105 = vmatpush1.msra.mxu0 0.0
    %106 = vmatprep.subr.mxu0 0.0
    %107 = vmatpush1.msra.mxu0 0.0
    %108 = vmatprep.subr.mxu0 0.0
    %109 = vmatpush1.msra.mxu0 0.0
    %110 = vmatprep.subr.mxu0 0.0
    %111 = vmatpush1.msra.mxu0 0.0
    %112 = vmatprep.subr.mxu0 0.0
    %113 = vmatpush1.msra.mxu0 0.0
    %114 = vmatprep.subr.mxu0 0.0
    %115 = vmatpush1.msra.mxu0 0.0
    %116 = vmatprep.subr.mxu0 0.0
    %117 = vmatpush1.msra.mxu0 0.0
    %118 = vmatprep.subr.mxu0 0.0
    %119 = vmatpush1.msra.mxu0 0.0
    %120 = vmatprep.subr.mxu0 0.0
    %121 = vmatpush1.msra.mxu0 0.0
    %122 = vmatprep.subr.mxu0 0.0
    %123 = vmatpush1.msra.mxu0 0.0
    %124 = vmatprep.subr.mxu0 0.0
    %125 = vmatpush1.msra.mxu0 0.0
    %126 = vmatprep.subr.mxu0 0.0
    %127 = vmatpush1.msra.mxu0 0.0
    %128 = vmatprep.subr.mxu0 0.0
    %129 = vmatpush1.msra.mxu0 0.0
    %130 = vmatprep.subr.mxu0 0.0
    %131 = vmatpush1.msra.mxu0 0.0
    %132 = vmatprep.subr.mxu0 0.0
    %133 = vmatpush1.msra.mxu0 0.0
    %134 = vmatprep.subr.mxu0 0.0
    %135 = vmatpush1.msra.mxu0 0.0
    %136 = vmatprep.subr.mxu0 0.0
    %137 = vmatpush1.msra.mxu0 0.0
    %138 = vmatprep.subr.mxu0 0.0
    %139 = vmatpush1.msra.mxu0 0.0
    %140 = vmatprep.subr.mxu0 0.0
    %141 = vmatpush1.msra.mxu0 0.0
    %142 = vmatprep.subr.mxu0 0.0
    %143 = vmatpush1.msra.mxu0 0.0
    %144 = vmatprep.subr.mxu0 0.0
    %145 = vmatpush1.msra.mxu0 0.0
    %146 = vmatprep.subr.mxu0 0.0
    %147 = vmatpush1.msra.mxu0 0.0
    %148 = vmatprep.subr.mxu0 0.0
    %149 = vmatpush1.msra.mxu0 0.0
    %150 = vmatprep.subr.mxu0 0.0
    %151 = vmatpush1.msra.mxu0 0.0
    %152 = vmatprep.subr.mxu0 0.0
    %153 = vmatpush1.msra.mxu0 0.0
    %154 = vmatprep.subr.mxu0 0.0
    %155 = vmatpush1.msra.mxu0 0.0
    %156 = vmatprep.subr.mxu0 0.0
    %157 = vmatpush1.msra.mxu0 0.0
    %158 = vmatprep.subr.mxu0 0.0
    %159 = vmatpush1.msra.mxu0 0.0
    %160 = vmatprep.subr.mxu0 0.0
    %161 = vmatpush1.msra.mxu0 0.0
    %162 = vmatprep.subr.mxu0 0.0
    %163 = vmatpush1.msra.mxu0 0.0
    %164 = vmatprep.mubr.f32.mxu0 0.0
    %165 = vmatmul.mubr.f32.gmra.mrb[0].mxu0 %v95
    %v166 = vpop.f32.mrb[0].mxu0
    %v167 = vadd.f32 %v91, %v166
    %v168 = vpop.f32.mrb[0].mxu0
    %169 = vmatprep.mubr.f32.mxu0 0.0
    %170 = vmatmul.mubr.f32.gmra.mrb[0].mxu0 %v98
    %v171 = vpop.f32.mrb[0].mxu0
    %v172 = vadd.f32 %v91, %v171
    %v173 = vpop.f32.mrb[0].mxu0
    %174 = vdwg.mxu0
    %v175 = vmul.f32 %v167, 0.5
    %v176 = vmul.f32 %v172, 0.5
    %v177 = vmul.f32 %v167, 0.70710677
    %v178 = vmul.f32 %v172, 0.70710677
    %v179 = verf.f32.pop %v177
    %v180 = verf.f32.pop %v178
    %v181 = vadd.f32 %v179, 1.0
    %v182 = vadd.f32 %v180, 1.0
    %v183 = vmul.f32 %v175, %v181
    %v184 = vmul.f32 %v176, %v182
    %v185 = vld [vmem:[%s4] sm:$0x1]
    %v187 = vlaneseq
    %v188 = vshrl.u32 %v187, 7
    %v189 = vsub.s32 0, %v188
    %v190 = vrot.slane %v185, %v189
    %v192 = vmul.f32 %v183, %v190
    %v193 = vmul.f32 %v184, %v190
    %v194 = vld [vmem:[%s5] sm:$0x1]
    %v196 = vlaneseq
    %v197 = vshrl.u32 %v196, 7
    %v198 = vsub.s32 0, %v197
    %v199 = vrot.slane %v194, %v198
    %v201 = vadd.f32 %v192, %v199
    %v202 = vadd.f32 %v193, %v199
    %v203 = vld [vmem:[#allocation7] sm:$0xff]
    %v204 = vld [vmem:[#allocation7 + $0x8] sm:$0xff]
    %v205 = vld [vmem:[#allocation7 + $0x10] sm:$0xff]
    %v206 = vld [vmem:[#allocation7 + $0x18] sm:$0xff]
    %v207 = vld [vmem:[#allocation7 + $0x20] sm:$0xff]
    %v208 = vld [vmem:[#allocation7 + $0x28] sm:$0xff]
    %v209 = vld [vmem:[#allocation7 + $0x30] sm:$0xff]
    %v210 = vld [vmem:[#allocation7 + $0x38] sm:$0xff]
    %v211 = vld [vmem:[#allocation7 + $0x40] sm:$0xff]
    %v212 = vld [vmem:[#allocation7 + $0x48] sm:$0xff]
    %v213 = vld [vmem:[#allocation7 + $0x50] sm:$0xff]
    %v214 = vld [vmem:[#allocation7 + $0x58] sm:$0xff]
    %v215 = vld [vmem:[#allocation7 + $0x60] sm:$0xff]
    %v216 = vld [vmem:[#allocation7 + $0x68] sm:$0xff]
    %v217 = vld [vmem:[#allocation7 + $0x70] sm:$0xff]
    %v218 = vld [vmem:[#allocation7 + $0x78] sm:$0xff]
    %s219 = scalar_lea.vmem %s3, 1
    %v220 = vld [vmem:[%s219] sm:$0x1]
    %v222 = vlaneseq
    %v223 = vshrl.u32 %v222, 7
    %v224 = vsub.s32 0, %v223
    %v225 = vrot.slane %v220, %v224
    %227 = vmatprep.subr.mxu0 0.0
    %228 = vmatpush1.msra.mxu0 %v203
    %229 = vmatprep.subr.mxu0 0.0
    %230 = vmatpush1.msra.mxu0 %v204
    %231 = vmatprep.subr.mxu0 0.0
    %232 = vmatpush1.msra.mxu0 %v205
    %233 = vmatprep.subr.mxu0 0.0
    %234 = vmatpush1.msra.mxu0 %v206
    %235 = vmatprep.subr.mxu0 0.0
    %236 = vmatpush1.msra.mxu0 %v207
    %237 = vmatprep.subr.mxu0 0.0
    %238 = vmatpush1.msra.mxu0 %v208
    %239 = vmatprep.subr.mxu0 0.0
    %240 = vmatpush1.msra.mxu0 %v209
    %241 = vmatprep.subr.mxu0 0.0
    %242 = vmatpush1.msra.mxu0 %v210
    %243 = vmatprep.subr.mxu0 0.0
    %244 = vmatpush1.msra.mxu0 %v211
    %245 = vmatprep.subr.mxu0 0.0
    %246 = vmatpush1.msra.mxu0 %v212
    %247 = vmatprep.subr.mxu0 0.0
    %248 = vmatpush1.msra.mxu0 %v213
    %249 = vmatprep.subr.mxu0 0.0
    %250 = vmatpush1.msra.mxu0 %v214
    %251 = vmatprep.subr.mxu0 0.0
    %252 = vmatpush1.msra.mxu0 %v215
    %253 = vmatprep.subr.mxu0 0.0
    %254 = vmatpush1.msra.mxu0 %v216
    %255 = vmatprep.subr.mxu0 0.0
    %256 = vmatpush1.msra.mxu0 %v217
    %257 = vmatprep.subr.mxu0 0.0
    %258 = vmatpush1.msra.mxu0 %v218
    %259 = vmatprep.subr.mxu0 0.0
    %260 = vmatpush1.msra.mxu0 0.0
    %261 = vmatprep.subr.mxu0 0.0
    %262 = vmatpush1.msra.mxu0 0.0
    %263 = vmatprep.subr.mxu0 0.0
    %264 = vmatpush1.msra.mxu0 0.0
    %265 = vmatprep.subr.mxu0 0.0
    %266 = vmatpush1.msra.mxu0 0.0
    %267 = vmatprep.subr.mxu0 0.0
    %268 = vmatpush1.msra.mxu0 0.0
    %269 = vmatprep.subr.mxu0 0.0
    %270 = vmatpush1.msra.mxu0 0.0
    %271 = vmatprep.subr.mxu0 0.0
    %272 = vmatpush1.msra.mxu0 0.0
    %273 = vmatprep.subr.mxu0 0.0
    %274 = vmatpush1.msra.mxu0 0.0
    %275 = vmatprep.subr.mxu0 0.0
    %276 = vmatpush1.msra.mxu0 0.0
    %277 = vmatprep.subr.mxu0 0.0
    %278 = vmatpush1.msra.mxu0 0.0
    %279 = vmatprep.subr.mxu0 0.0
    %280 = vmatpush1.msra.mxu0 0.0
    %281 = vmatprep.subr.mxu0 0.0
    %282 = vmatpush1.msra.mxu0 0.0
    %283 = vmatprep.subr.mxu0 0.0
    %284 = vmatpush1.msra.mxu0 0.0
    %285 = vmatprep.subr.mxu0 0.0
    %286 = vmatpush1.msra.mxu0 0.0
    %287 = vmatprep.subr.mxu0 0.0
    %288 = vmatpush1.msra.mxu0 0.0
    %289 = vmatprep.subr.mxu0 0.0
    %290 = vmatpush1.msra.mxu0 0.0
    %291 = vmatprep.mubr.f32.mxu0 0.0
    %292 = vmatmul.mubr.f32.gmra.mrb[0].mxu0 %v201
    %v293 = vpop.f32.mrb[0].mxu0
    %v294 = vadd.f32 %v225, %v293
    %v295 = vpop.f32.mrb[0].mxu0
    %296 = vmatprep.mubr.f32.mxu0 0.0
    %297 = vmatmul.mubr.f32.gmra.mrb[0].mxu0 %v202
    %v298 = vpop.f32.mrb[0].mxu0
    %v299 = vadd.f32 %v225, %v298
    %v300 = vpop.f32.mrb[0].mxu0
    %301 = vdwg.mxu0
    %v302 = vmul.f32 %v294, 0.5
    %v303 = vmul.f32 %v299, 0.5
    %v304 = vmul.f32 %v294, 0.70710677
    %v305 = vmul.f32 %v299, 0.70710677
    %v306 = verf.f32.pop %v304
    %v307 = verf.f32.pop %v305
    %v308 = vadd.f32 %v306, 1.0
    %v309 = vadd.f32 %v307, 1.0
    %v310 = vmul.f32 %v302, %v308
    %v311 = vmul.f32 %v303, %v309
    %s312 = scalar_lea.vmem %s4, 1
    %v313 = vld [vmem:[%s312] sm:$0x1]
    %v315 = vlaneseq
    %v316 = vshrl.u32 %v315, 7
    %v317 = vsub.s32 0, %v316
    %v318 = vrot.slane %v313, %v317
    %v320 = vmul.f32 %v310, %v318
    %v321 = vmul.f32 %v311, %v318
    %s322 = scalar_lea.vmem %s5, 1
    %v323 = vld [vmem:[%s322] sm:$0x1]
    %v325 = vlaneseq
    %v326 = vshrl.u32 %v325, 7
    %v327 = vsub.s32 0, %v326
    %v328 = vrot.slane %v323, %v327
    %v330 = vadd.f32 %v320, %v328
    %v331 = vadd.f32 %v321, %v328
    %v332 = vadd.f32 %v201, %v330
    %v333 = vadd.f32 %v202, %v331
    %s334 = scalar_lea.vmem [#allocation7], 128
    %v335 = vld [vmem:[%s334] sm:$0xff]
    %v336 = vld [vmem:[%s334 + $0x8] sm:$0xff]
    %v337 = vld [vmem:[%s334 + $0x10] sm:$0xff]
    %v338 = vld [vmem:[%s334 + $0x18] sm:$0xff]
    %v339 = vld [vmem:[%s334 + $0x20] sm:$0xff]
    %v340 = vld [vmem:[%s334 + $0x28] sm:$0xff]
    %v341 = vld [vmem:[%s334 + $0x30] sm:$0xff]
    %v342 = vld [vmem:[%s334 + $0x38] sm:$0xff]
    %v343 = vld [vmem:[%s334 + $0x40] sm:$0xff]
    %v344 = vld [vmem:[%s334 + $0x48] sm:$0xff]
    %v345 = vld [vmem:[%s334 + $0x50] sm:$0xff]
    %v346 = vld [vmem:[%s334 + $0x58] sm:$0xff]
    %v347 = vld [vmem:[%s334 + $0x60] sm:$0xff]
    %v348 = vld [vmem:[%s334 + $0x68] sm:$0xff]
    %v349 = vld [vmem:[%s334 + $0x70] sm:$0xff]
    %v350 = vld [vmem:[%s334 + $0x78] sm:$0xff]
    %s351 = scalar_lea.vmem %s3, 2
    %v352 = vld [vmem:[%s351] sm:$0x1]
    %v354 = vlaneseq
    %v355 = vshrl.u32 %v354, 7
    %v356 = vsub.s32 0, %v355
    %v357 = vrot.slane %v352, %v356
    %359 = vmatprep.subr.mxu0 0.0
    %360 = vmatpush1.msra.mxu0 %v335
    %361 = vmatprep.subr.mxu0 0.0
    %362 = vmatpush1.msra.mxu0 %v336
    %363 = vmatprep.subr.mxu0 0.0
    %364 = vmatpush1.msra.mxu0 %v337
    %365 = vmatprep.subr.mxu0 0.0
    %366 = vmatpush1.msra.mxu0 %v338
    %367 = vmatprep.subr.mxu0 0.0
    %368 = vmatpush1.msra.mxu0 %v339
    %369 = vmatprep.subr.mxu0 0.0
    %370 = vmatpush1.msra.mxu0 %v340
    %371 = vmatprep.subr.mxu0 0.0
    %372 = vmatpush1.msra.mxu0 %v341
    %373 = vmatprep.subr.mxu0 0.0
    %374 = vmatpush1.msra.mxu0 %v342
    %375 = vmatprep.subr.mxu0 0.0
    %376 = vmatpush1.msra.mxu0 %v343
    %377 = vmatprep.subr.mxu0 0.0
    %378 = vmatpush1.msra.mxu0 %v344
    %379 = vmatprep.subr.mxu0 0.0
    %380 = vmatpush1.msra.mxu0 %v345
    %381 = vmatprep.subr.mxu0 0.0
    %382 = vmatpush1.msra.mxu0 %v346
    %383 = vmatprep.subr.mxu0 0.0
    %384 = vmatpush1.msra.mxu0 %v347
    %385 = vmatprep.subr.mxu0 0.0
    %386 = vmatpush1.msra.mxu0 %v348
    %387 = vmatprep.subr.mxu0 0.0
    %388 = vmatpush1.msra.mxu0 %v349
    %389 = vmatprep.subr.mxu0 0.0
    %390 = vmatpush1.msra.mxu0 %v350
    %391 = vmatprep.subr.mxu0 0.0
    %392 = vmatpush1.msra.mxu0 0.0
    %393 = vmatprep.subr.mxu0 0.0
    %394 = vmatpush1.msra.mxu0 0.0
    %395 = vmatprep.subr.mxu0 0.0
    %396 = vmatpush1.msra.mxu0 0.0
    %397 = vmatprep.subr.mxu0 0.0
    %398 = vmatpush1.msra.mxu0 0.0
    %399 = vmatprep.subr.mxu0 0.0
    %400 = vmatpush1.msra.mxu0 0.0
    %401 = vmatprep.subr.mxu0 0.0
    %402 = vmatpush1.msra.mxu0 0.0
    %403 = vmatprep.subr.mxu0 0.0
    %404 = vmatpush1.msra.mxu0 0.0
    %405 = vmatprep.subr.mxu0 0.0
    %406 = vmatpush1.msra.mxu0 0.0
    %407 = vmatprep.subr.mxu0 0.0
    %408 = vmatpush1.msra.mxu0 0.0
    %409 = vmatprep.subr.mxu0 0.0
    %410 = vmatpush1.msra.mxu0 0.0
    %411 = vmatprep.subr.mxu0 0.0
    %412 = vmatpush1.msra.mxu0 0.0
    %413 = vmatprep.subr.mxu0 0.0
    %414 = vmatpush1.msra.mxu0 0.0
    %415 = vmatprep.subr.mxu0 0.0
    %416 = vmatpush1.msra.mxu0 0.0
    %417 = vmatprep.subr.mxu0 0.0
    %418 = vmatpush1.msra.mxu0 0.0
    %419 = vmatprep.subr.mxu0 0.0
    %420 = vmatpush1.msra.mxu0 0.0
    %421 = vmatprep.subr.mxu0 0.0
    %422 = vmatpush1.msra.mxu0 0.0
    %423 = vmatprep.mubr.f32.mxu0 0.0
    %424 = vmatmul.mubr.f32.gmra.mrb[0].mxu0 %v332
    %v425 = vpop.f32.mrb[0].mxu0
    %v426 = vadd.f32 %v357, %v425
    %v427 = vpop.f32.mrb[0].mxu0
    %428 = vmatprep.mubr.f32.mxu0 0.0
    %429 = vmatmul.mubr.f32.gmra.mrb[0].mxu0 %v333
    %v430 = vpop.f32.mrb[0].mxu0
    %v431 = vadd.f32 %v357, %v430
    %v432 = vpop.f32.mrb[0].mxu0
    %433 = vdwg.mxu0
    %v434 = vmul.f32 %v426, 0.5
    %v435 = vmul.f32 %v431, 0.5
    %v436 = vmul.f32 %v426, 0.70710677
    %v437 = vmul.f32 %v431, 0.70710677
    %v438 = verf.f32.pop %v436
    %v439 = verf.f32.pop %v437
    %v440 = vadd.f32 %v438, 1.0
    %v441 = vadd.f32 %v439, 1.0
    %v442 = vmul.f32 %v434, %v440
    %v443 = vmul.f32 %v435, %v441
    %s444 = scalar_lea.vmem %s4, 2
    %v445 = vld [vmem:[%s444] sm:$0x1]
    %v447 = vlaneseq
    %v448 = vshrl.u32 %v447, 7
    %v449 = vsub.s32 0, %v448
    %v450 = vrot.slane %v445, %v449
    %v452 = vmul.f32 %v442, %v450
    %v453 = vmul.f32 %v443, %v450
    %s454 = scalar_lea.vmem %s5, 2
    %v455 = vld [vmem:[%s454] sm:$0x1]
    %v457 = vlaneseq
    %v458 = vshrl.u32 %v457, 7
    %v459 = vsub.s32 0, %v458
    %v460 = vrot.slane %v455, %v459
    %v462 = vadd.f32 %v452, %v460
    %v463 = vadd.f32 %v453, %v460
    %v464 = vadd.f32 %v332, %v462
    %v465 = vadd.f32 %v333, %v463
    %v466 = vld [vmem:[#allocation8] sm:$0xff]
    %v467 = vld [vmem:[#allocation8 + $0x8] sm:$0xff]
    %v468 = vld [vmem:[#allocation8 + $0x10] sm:$0xff]
    %v469 = vld [vmem:[#allocation8 + $0x18] sm:$0xff]
    %v470 = vld [vmem:[#allocation8 + $0x20] sm:$0xff]
    %v471 = vld [vmem:[#allocation8 + $0x28] sm:$0xff]
    %v472 = vld [vmem:[#allocation8 + $0x30] sm:$0xff]
    %v473 = vld [vmem:[#allocation8 + $0x38] sm:$0xff]
    %v474 = vld [vmem:[#allocation8 + $0x40] sm:$0xff]
    %v475 = vld [vmem:[#allocation8 + $0x48] sm:$0xff]
    %v476 = vld [vmem:[#allocation8 + $0x50] sm:$0xff]
    %v477 = vld [vmem:[#allocation8 + $0x58] sm:$0xff]
    %v478 = vld [vmem:[#allocation8 + $0x60] sm:$0xff]
    %v479 = vld [vmem:[#allocation8 + $0x68] sm:$0xff]
    %v480 = vld [vmem:[#allocation8 + $0x70] sm:$0xff]
    %v481 = vld [vmem:[#allocation8 + $0x78] sm:$0xff]
    %482 = vmatprep.subr.mxu0 0.0
    %483 = vmatpush1.msra.mxu0 %v466
    %484 = vmatprep.subr.mxu0 0.0
    %485 = vmatpush1.msra.mxu0 %v467
    %486 = vmatprep.subr.mxu0 0.0
    %487 = vmatpush1.msra.mxu0 %v468
    %488 = vmatprep.subr.mxu0 0.0
    %489 = vmatpush1.msra.mxu0 %v469
    %490 = vmatprep.subr.mxu0 0.0
    %491 = vmatpush1.msra.mxu0 %v470
    %492 = vmatprep.subr.mxu0 0.0
    %493 = vmatpush1.msra.mxu0 %v471
    %494 = vmatprep.subr.mxu0 0.0
    %495 = vmatpush1.msra.mxu0 %v472
    %496 = vmatprep.subr.mxu0 0.0
    %497 = vmatpush1.msra.mxu0 %v473
    %498 = vmatprep.subr.mxu0 0.0
    %499 = vmatpush1.msra.mxu0 %v474
    %500 = vmatprep.subr.mxu0 0.0
    %501 = vmatpush1.msra.mxu0 %v475
    %502 = vmatprep.subr.mxu0 0.0
    %503 = vmatpush1.msra.mxu0 %v476
    %504 = vmatprep.subr.mxu0 0.0
    %505 = vmatpush1.msra.mxu0 %v477
    %506 = vmatprep.subr.mxu0 0.0
    %507 = vmatpush1.msra.mxu0 %v478
    %508 = vmatprep.subr.mxu0 0.0
    %509 = vmatpush1.msra.mxu0 %v479
    %510 = vmatprep.subr.mxu0 0.0
    %511 = vmatpush1.msra.mxu0 %v480
    %512 = vmatprep.subr.mxu0 0.0
    %513 = vmatpush1.msra.mxu0 %v481
    %514 = vmatprep.subr.mxu0 0.0
    %515 = vmatpush1.msra.mxu0 0.0
    %516 = vmatprep.subr.mxu0 0.0
    %517 = vmatpush1.msra.mxu0 0.0
    %518 = vmatprep.subr.mxu0 0.0
    %519 = vmatpush1.msra.mxu0 0.0
    %520 = vmatprep.subr.mxu0 0.0
    %521 = vmatpush1.msra.mxu0 0.0
    %522 = vmatprep.subr.mxu0 0.0
    %523 = vmatpush1.msra.mxu0 0.0
    %524 = vmatprep.subr.mxu0 0.0
    %525 = vmatpush1.msra.mxu0 0.0
    %526 = vmatprep.subr.mxu0 0.0
    %527 = vmatpush1.msra.mxu0 0.0
    %528 = vmatprep.subr.mxu0 0.0
    %529 = vmatpush1.msra.mxu0 0.0
    %530 = vmatprep.subr.mxu0 0.0
    %531 = vmatpush1.msra.mxu0 0.0
    %532 = vmatprep.subr.mxu0 0.0
    %533 = vmatpush1.msra.mxu0 0.0
    %534 = vmatprep.subr.mxu0 0.0
    %535 = vmatpush1.msra.mxu0 0.0
    %536 = vmatprep.subr.mxu0 0.0
    %537 = vmatpush1.msra.mxu0 0.0
    %538 = vmatprep.subr.mxu0 0.0
    %539 = vmatpush1.msra.mxu0 0.0
    %540 = vmatprep.subr.mxu0 0.0
    %541 = vmatpush1.msra.mxu0 0.0
    %542 = vmatprep.subr.mxu0 0.0
    %543 = vmatpush1.msra.mxu0 0.0
    %544 = vmatprep.subr.mxu0 0.0
    %545 = vmatpush1.msra.mxu0 0.0
    %546 = vmatprep.mubr.f32.mxu0 0.0
    %547 = vmatmul.mubr.f32.gmra.mrb[0].mxu0 %v464
    %v548 = vpop.f32.mrb[0].mxu0
    %v549 = vadd.f32 0.0, %v548
    %v550 = vpop.f32.mrb[0].mxu0
    %551 = vmatprep.mubr.f32.mxu0 0.0
    %552 = vmatmul.mubr.f32.gmra.mrb[0].mxu0 %v465
    %v553 = vpop.f32.mrb[0].mxu0
    %v554 = vadd.f32 0.0, %v553
    %v555 = vpop.f32.mrb[0].mxu0
    %556 = vdwg.mxu0
    %557 = vst [vmem:[#allocation10] sm:$0xff] %v549
    %558 = vst [vmem:[#allocation10 + $0x8] sm:$0xff] %v554
    // Predicated region
    $region46: #{tpu_custom_call.1} parent=1 // pred_check
      _
    $region47: #{tpu_custom_call.1} parent=1 // pred_check_branch
      %560 = sbr.rel (0) target = $region49
    $region48: #{tpu_custom_call.1} parent=1 // pred_region
      %s562 = ssub.s32 256, 256
      %563 = vsyncadd [#allocation4], %s562
      %s564 = sshll.u32 [#allocation10], 4
      %s565 = int_to_ptr.vmem [resolvable:$true] %s564
      %570 = dma.vmem_to_hbm [thread:$0]  %s565, 256, %s7, [#allocation4], 128, 128, 8
    $region49: #{tpu_custom_call.1} parent=1 // pred_fallthru
      _
    // Predicated region
    $region50: #{tpu_custom_call.1} parent=1 // pred_check
      _
    $region51: #{tpu_custom_call.1} parent=1 // pred_check_branch
      %572 = sbr.rel (0) target = $region53
    $region52: #{tpu_custom_call.1} parent=1 // pred_region
      %573 = dma.done [#allocation4], 256
    $region53: #{tpu_custom_call.1} parent=1 // pred_fallthru
      _
    %574 = vsyncpa [#allocation3], 1
    %575 = vsyncpa [#allocation6], 1
    %576 = vsyncpa [#allocation9], 1
    %577 = vsyncpa [#allocation4], 1

</llo_original>
